<compile_context>
chip_gen: v5e
topology: v5e:2x2
jax: 0.10.0
libtpu: 0.0.40
codegen_flags: <defaults>
</compile_context>

<pallas_src>
import jax
import jax.numpy as jnp
import numpy as np
from jax import lax
from jax.experimental import pallas as pl
from jax.experimental.pallas import tpu as pltpu

# ----------------------------- config ---------------------------------------
EMBED = 32
HEADS = 4
HEAD_DIM = EMBED // HEADS
FWD_EXP = 4
HIDDEN = FWD_EXP * EMBED
SEQ = 8
BATCH = 2
LN_EPS = 1e-5


# ----------------------------- kernel ---------------------------------------
def _layernorm(x, gamma, beta):
    # x: (T, E) f32, gamma/beta: (1, E) f32
    mean = jnp.mean(x, axis=-1, keepdims=True)
    var = jnp.mean((x - mean) ** 2, axis=-1, keepdims=True)
    inv = lax.rsqrt(var + LN_EPS)
    return (x - mean) * inv * gamma + beta


def transformer_block_kernel(
    x_ref,      # (3, T, E) f32   stacked [query, key, value] tokens
    bias_ref,   # (T, T)    f32   additive attention mask (0 / -1e20)
    qkw_ref,    # (2, E, E) bf16  [Wq * 1/sqrt(E), Wk]
    vow_ref,    # (H, E, E) bf16  folded Wvo_h = Wv_h @ Wo_h
    w1_ref,     # (E, F)    bf16
    w2_ref,     # (F, E)    bf16
    vec_ref,    # (12, E)   f32   packed bias/gamma/beta vectors
    bf1_ref,    # (1, F)    f32
    out_ref,    # (T, E)
    acc_ref,    # (T, E)    f32 VMEM scratch (head-sum accumulator)
):
    f32, bf16 = jnp.float32, jnp.bfloat16
    D = HEAD_DIM

    xq = x_ref[0]                       # (T, E) f32 — also the residual stream
    xk = x_ref[1]
    xv = x_ref[2]
    T = xq.shape[0]
    xq_b, xk_b, xv_b = xq.astype(bf16), xk.astype(bf16), xv.astype(bf16)
    bias = bias_ref[...]                # (T, T) f32

    # unpack the f32 vector slab (rows are documented in the wrapper)
    vecs = vec_ref[...]                 # (12, E)
    bq_s, bk = vecs[0:1], vecs[1:2]
    bvo = vecs[2:6]                     # (H, E)
    bo, g1, be1 = vecs[6:7], vecs[7:8], vecs[8:9]
    bf2, g2, be2 = vecs[9:10], vecs[10:11], vecs[11:12]

    # --- full-width Q/K projections (bf16 MXU operands, f32 accumulate) ------
    # 1/sqrt(E) is already folded into Wq and bq by the wrapper.
    q = (jnp.dot(xq_b, qkw_ref[0], preferred_element_type=f32) + bq_s).astype(bf16)
    k = (jnp.dot(xk_b, qkw_ref[1], preferred_element_type=f32) + bk).astype(bf16)

    # --- per-head energies, then ONE batched softmax over all heads ----------
    energies = []
    for h in range(HEADS):
        q_h = q[:, h * D:(h + 1) * D]           # static 8-lane slice (T, D)
        k_h = k[:, h * D:(h + 1) * D]
        e_h = lax.dot_general(q_h, k_h,
                              (((1,), (1,)), ((), ())),
                              preferred_element_type=f32)        # (T, T)
        energies.append(e_h)
    e = jnp.stack(energies, axis=0) + bias                       # (H, T, T)
    e = e - jnp.max(e, axis=-1, keepdims=True)
    p = jnp.exp(e)
    attn = (p * pl.reciprocal(jnp.sum(p, axis=-1, keepdims=True), approx=True)
            ).astype(bf16)                                       # (H, T, T)

    # --- folded V*Wo projection per head, accumulated into VMEM scratch ------
    acc_ref[...] = jnp.zeros_like(acc_ref)
    for h in range(HEADS):
        vo_h = (jnp.dot(xv_b, vow_ref[h], preferred_element_type=f32)
                + bvo[h:h + 1]).astype(bf16)                     # (T, E)
        acc_ref[...] += jnp.dot(attn[h], vo_h, preferred_element_type=f32)
    att = acc_ref[...] + bo                                      # (T, E) f32

    # --- residual + norm1 (dropout == identity at eval) ----------------------
    x = _layernorm(att + xq, g1, be1)

    # --- feed forward (bf16 MXU operands, f32 elementwise) -------------------
    h1 = jnp.dot(x.astype(bf16), w1_ref[...], preferred_element_type=f32) + bf1_ref[...]
    h1 = jnp.maximum(h1, 0.0)
    ff = jnp.dot(h1.astype(bf16), w2_ref[...], preferred_element_type=f32) + bf2

    # --- residual + norm2 -----------------------------------------------------
    out = _layernorm(ff + x, g2, be2)
    out_ref[...] = out.astype(out_ref.dtype)


# ----------------------------- wrapper ---------------------------------------
def transformer_block(value, key, query, mask, params):
    N, L, E = query.shape
    T = N * L
    H, D = HEADS, HEAD_DIM
    F = params["w1"].shape[1]
    f32, bf16 = jnp.float32, jnp.bfloat16
    scale = 1.0 / float(np.sqrt(E))

    # ---- wrapper-side layout plumbing & algebra folding (plain XLA ops) ------
    # Token slab kept f32 so the residual stream stays exact; activations are
    # cast to bf16 inside the kernel only where they feed the MXU.
    x_in = jnp.stack([query.reshape(T, E),
                      key.reshape(T, E),
                      value.reshape(T, E)]).astype(f32)                 # (3,T,E)

    # Additive attention bias over flattened tokens: user mask within a batch,
    # -1e20 across batches (whole-batch attention as one (T,T) energy per head).
    neg = jnp.float32(-1e20)
    in_batch = jnp.where(mask > 0, jnp.float32(0.0), neg)               # (N,Lq,Lk)
    same_batch = jnp.eye(N, dtype=bool)[:, None, :, None]               # (N,1,N,1)
    bias = jnp.where(same_batch, in_batch[:, :, None, :], neg)
    bias = bias.reshape(T, T).astype(f32)

    # Q/K: full-width projections, 1/sqrt(E) folded into Wq and bq.
    qk_w = jnp.stack([params["wq"] * scale, params["wk"]]).astype(bf16)  # (2,E,E)

    # Fold Wo into the V projection: Wvo_h = Wv_h @ Wo_h, bvo_h = bv_h @ Wo_h.
    wv_h = params["wv"].reshape(E, H, D).transpose(1, 0, 2)              # (H,E,D)
    wo_h = params["wo"].reshape(H, D, E)                                 # (H,D,E)
    vo_w = jnp.einsum("hed,hdf->hef", wv_h, wo_h).astype(bf16)           # (H,E,E)
    bvo = jnp.einsum("hd,hde->he", params["bv"].reshape(H, D), wo_h)     # (H,E)

    # Packed f32 vector slab (12, E):
    #   0: bq*scale  1: bk  2..5: bvo_h  6: bo  7: g1  8: be1  9: bf2  10: g2  11: be2
    vecs = jnp.concatenate([
        params["bq"] * scale,
        params["bk"],
        bvo,
        params["bo"],
        params["g1"], params["be1"],
        params["bf2"],
        params["g2"], params["be2"],
    ], axis=0).astype(f32)

    w1 = params["w1"].astype(bf16)
    w2 = params["w2"].astype(bf16)
    bf1 = params["bf1"].astype(f32)

    out = pl.pallas_call(
        transformer_block_kernel,
        out_shape=jax.ShapeDtypeStruct((T, E), query.dtype),
        scratch_shapes=[pltpu.VMEM((T, E), jnp.float32)],
    )(x_in, bias, qk_w, vo_w, w1, w2, vecs, bf1)
    return out.reshape(N, L, E)


# ----------------------------- pure-JAX reference -----------------------------
def reference(value, key, query, mask, p):
    N, L, E = query.shape
    v = value @ p["wv"] + p["bv"][0]
    k = key @ p["wk"] + p["bk"][0]
    q = query @ p["wq"] + p["bq"][0]
    v = v.reshape(N, L, HEADS, HEAD_DIM)
    k = k.reshape(N, L, HEADS, HEAD_DIM)
    q = q.reshape(N, L, HEADS, HEAD_DIM)
    energy = jnp.einsum("nqhd,nkhd->nhqk", q, k)
    energy = jnp.where(mask[:, None, :, :] == 0, -1e20, energy)
    attn = jax.nn.softmax(energy / jnp.sqrt(jnp.float32(E)), axis=3)
    out = jnp.einsum("nhqk,nkhd->nqhd", attn, v).reshape(N, L, E)
    att = out @ p["wo"] + p["bo"][0]

    def ln(x, g, b):
        m = jnp.mean(x, axis=-1, keepdims=True)
        var = jnp.mean((x - m) ** 2, axis=-1, keepdims=True)
        return (x - m) / jnp.sqrt(var + LN_EPS) * g[0] + b[0]

    x = ln(att + query, p["g1"], p["be1"])
    ff = jnp.maximum(x @ p["w1"] + p["bf1"][0], 0.0) @ p["w2"] + p["bf2"][0]
    return ln(ff + x, p["g2"], p["be2"])


# ----------------------------- main ------------------------------------------
if __name__ == "__main__":
    rng = jax.random.PRNGKey(0)
    keys = jax.random.split(rng, 16)

    def w(k, shape, scale=0.05):
        return jax.random.normal(k, shape, dtype=jnp.float32) * scale

    params = {
        "wv": w(keys[0], (EMBED, EMBED)), "bv": w(keys[1], (1, EMBED)),
        "wk": w(keys[2], (EMBED, EMBED)), "bk": w(keys[3], (1, EMBED)),
        "wq": w(keys[4], (EMBED, EMBED)), "bq": w(keys[5], (1, EMBED)),
        "wo": w(keys[6], (EMBED, EMBED)), "bo": w(keys[7], (1, EMBED)),
        "g1": jnp.ones((1, EMBED), jnp.float32), "be1": jnp.zeros((1, EMBED), jnp.float32),
        "w1": w(keys[8], (EMBED, HIDDEN)), "bf1": w(keys[9], (1, HIDDEN)),
        "w2": w(keys[10], (HIDDEN, EMBED)), "bf2": w(keys[11], (1, EMBED)),
        "g2": jnp.ones((1, EMBED), jnp.float32), "be2": jnp.zeros((1, EMBED), jnp.float32),
    }

    value = jax.random.normal(keys[12], (BATCH, SEQ, EMBED), dtype=jnp.float32)
    key_in = jax.random.normal(keys[13], (BATCH, SEQ, EMBED), dtype=jnp.float32)
    query = jax.random.normal(keys[14], (BATCH, SEQ, EMBED), dtype=jnp.float32)
    # causal-style mask (1 = attend, 0 = masked), shape (N, Lq, Lk)
    mask = jnp.broadcast_to(
        jnp.tril(jnp.ones((SEQ, SEQ), jnp.float32)), (BATCH, SEQ, SEQ)
    )

    out = transformer_block(value, key_in, query, mask, params)
    out = jax.block_until_ready(out)

    ref = reference(value, key_in, query, mask, params)
    # Tolerance 2e-2: bf16 MXU operands (f32 accumulation / softmax / LayerNorm)
    # plus the approximate EUP reciprocal in the softmax denominator.
    np.testing.assert_allclose(np.asarray(out), np.asarray(ref), atol=2e-2, rtol=2e-2)

    print("KERNEL_OK")
</pallas_src>

<mosaic_0001>
module attributes {stable_mosaic.version = 11 : i64} {
  func.func @transformer_block_kernel(%arg0: memref<3x16x32xf32, #tpu.memory_space<vmem>>, %arg1: memref<16x16xf32, #tpu.memory_space<vmem>>, %arg2: memref<2x32x32xbf16, #tpu.memory_space<vmem>>, %arg3: memref<4x32x32xbf16, #tpu.memory_space<vmem>>, %arg4: memref<32x128xbf16, #tpu.memory_space<vmem>>, %arg5: memref<128x32xbf16, #tpu.memory_space<vmem>>, %arg6: memref<12x32xf32, #tpu.memory_space<vmem>>, %arg7: memref<1x128xf32, #tpu.memory_space<vmem>>, %arg8: memref<16x32xf32, #tpu.memory_space<vmem>>, %arg9: memref<16x32xf32, #tpu.memory_space<vmem>>) attributes {dimension_semantics = [], scalar_prefetch = 0 : i64, scratch_operands = 1 : i64, tpu.core_type = #tpu.core_type<tc>} {
    %c0 = arith.constant 0 : index
    %c0_0 = arith.constant 0 : index
    %c0_1 = arith.constant 0 : index
    %0 = vector.load %arg0[%c0, %c0_0, %c0_1] : memref<3x16x32xf32, #tpu.memory_space<vmem>>, vector<1x16x32xf32>
    %1 = vector.shape_cast %0 : vector<1x16x32xf32> to vector<16x32xf32>
    %c1 = arith.constant 1 : index
    %c0_2 = arith.constant 0 : index
    %c0_3 = arith.constant 0 : index
    %2 = vector.load %arg0[%c1, %c0_2, %c0_3] : memref<3x16x32xf32, #tpu.memory_space<vmem>>, vector<1x16x32xf32>
    %3 = vector.shape_cast %2 : vector<1x16x32xf32> to vector<16x32xf32>
    %c2 = arith.constant 2 : index
    %c0_4 = arith.constant 0 : index
    %c0_5 = arith.constant 0 : index
    %4 = vector.load %arg0[%c2, %c0_4, %c0_5] : memref<3x16x32xf32, #tpu.memory_space<vmem>>, vector<1x16x32xf32>
    %5 = vector.shape_cast %4 : vector<1x16x32xf32> to vector<16x32xf32>
    %6 = arith.truncf %1 : vector<16x32xf32> to vector<16x32xbf16>
    %7 = arith.truncf %3 : vector<16x32xf32> to vector<16x32xbf16>
    %8 = arith.truncf %5 : vector<16x32xf32> to vector<16x32xbf16>
    %c0_6 = arith.constant 0 : index
    %c0_7 = arith.constant 0 : index
    %9 = vector.load %arg1[%c0_6, %c0_7] : memref<16x16xf32, #tpu.memory_space<vmem>>, vector<16x16xf32>
    %c0_8 = arith.constant 0 : index
    %c0_9 = arith.constant 0 : index
    %10 = vector.load %arg6[%c0_8, %c0_9] : memref<12x32xf32, #tpu.memory_space<vmem>>, vector<12x32xf32>
    %11 = vector.extract_strided_slice %10 {offsets = [0, 0], sizes = [1, 32], strides = [1, 1]} : vector<12x32xf32> to vector<1x32xf32>
    %12 = vector.extract_strided_slice %10 {offsets = [1, 0], sizes = [1, 32], strides = [1, 1]} : vector<12x32xf32> to vector<1x32xf32>
    %13 = vector.extract_strided_slice %10 {offsets = [2, 0], sizes = [4, 32], strides = [1, 1]} : vector<12x32xf32> to vector<4x32xf32>
    %14 = vector.extract_strided_slice %10 {offsets = [6, 0], sizes = [1, 32], strides = [1, 1]} : vector<12x32xf32> to vector<1x32xf32>
    %15 = vector.extract_strided_slice %10 {offsets = [7, 0], sizes = [1, 32], strides = [1, 1]} : vector<12x32xf32> to vector<1x32xf32>
    %16 = vector.extract_strided_slice %10 {offsets = [8, 0], sizes = [1, 32], strides = [1, 1]} : vector<12x32xf32> to vector<1x32xf32>
    %17 = vector.extract_strided_slice %10 {offsets = [9, 0], sizes = [1, 32], strides = [1, 1]} : vector<12x32xf32> to vector<1x32xf32>
    %18 = vector.extract_strided_slice %10 {offsets = [10, 0], sizes = [1, 32], strides = [1, 1]} : vector<12x32xf32> to vector<1x32xf32>
    %19 = vector.extract_strided_slice %10 {offsets = [11, 0], sizes = [1, 32], strides = [1, 1]} : vector<12x32xf32> to vector<1x32xf32>
    %c0_10 = arith.constant 0 : index
    %c0_11 = arith.constant 0 : index
    %c0_12 = arith.constant 0 : index
    %20 = vector.load %arg2[%c0_10, %c0_11, %c0_12] : memref<2x32x32xbf16, #tpu.memory_space<vmem>>, vector<1x32x32xbf16>
    %21 = vector.shape_cast %20 : vector<1x32x32xbf16> to vector<32x32xbf16>
    %cst = arith.constant dense<0.000000e+00> : vector<16x32xf32>
    %22 = tpu.matmul %6, %21, %cst {dimension_numbers = #tpu.dot_dimension_numbers<[1], [0], [0], [1], [0, 0, 1, 1], [], []>} : vector<16x32xbf16>, vector<32x32xbf16>, vector<16x32xf32> -> vector<16x32xf32>
    %23 = vector.broadcast %11 : vector<1x32xf32> to vector<16x32xf32>
    %24 = arith.addf %22, %23 : vector<16x32xf32>
    %25 = arith.truncf %24 : vector<16x32xf32> to vector<16x32xbf16>
    %c1_13 = arith.constant 1 : index
    %c0_14 = arith.constant 0 : index
    %c0_15 = arith.constant 0 : index
    %26 = vector.load %arg2[%c1_13, %c0_14, %c0_15] : memref<2x32x32xbf16, #tpu.memory_space<vmem>>, vector<1x32x32xbf16>
    %27 = vector.shape_cast %26 : vector<1x32x32xbf16> to vector<32x32xbf16>
    %cst_16 = arith.constant dense<0.000000e+00> : vector<16x32xf32>
    %28 = tpu.matmul %7, %27, %cst_16 {dimension_numbers = #tpu.dot_dimension_numbers<[1], [0], [0], [1], [0, 0, 1, 1], [], []>} : vector<16x32xbf16>, vector<32x32xbf16>, vector<16x32xf32> -> vector<16x32xf32>
    %29 = vector.broadcast %12 : vector<1x32xf32> to vector<16x32xf32>
    %30 = arith.addf %28, %29 : vector<16x32xf32>
    %31 = arith.truncf %30 : vector<16x32xf32> to vector<16x32xbf16>
    %32 = vector.extract_strided_slice %25 {offsets = [0, 0], sizes = [16, 8], strides = [1, 1]} : vector<16x32xbf16> to vector<16x8xbf16>
    %33 = vector.extract_strided_slice %31 {offsets = [0, 0], sizes = [16, 8], strides = [1, 1]} : vector<16x32xbf16> to vector<16x8xbf16>
    %cst_17 = arith.constant dense<0.000000e+00> : vector<16x16xf32>
    %34 = tpu.matmul %32, %33, %cst_17 {dimension_numbers = #tpu.dot_dimension_numbers<[1], [1], [0], [0], [0, 0, 1, 0], [], []>} : vector<16x8xbf16>, vector<16x8xbf16>, vector<16x16xf32> -> vector<16x16xf32>
    %35 = vector.extract_strided_slice %25 {offsets = [0, 8], sizes = [16, 8], strides = [1, 1]} : vector<16x32xbf16> to vector<16x8xbf16>
    %36 = vector.extract_strided_slice %31 {offsets = [0, 8], sizes = [16, 8], strides = [1, 1]} : vector<16x32xbf16> to vector<16x8xbf16>
    %cst_18 = arith.constant dense<0.000000e+00> : vector<16x16xf32>
    %37 = tpu.matmul %35, %36, %cst_18 {dimension_numbers = #tpu.dot_dimension_numbers<[1], [1], [0], [0], [0, 0, 1, 0], [], []>} : vector<16x8xbf16>, vector<16x8xbf16>, vector<16x16xf32> -> vector<16x16xf32>
    %38 = vector.extract_strided_slice %25 {offsets = [0, 16], sizes = [16, 8], strides = [1, 1]} : vector<16x32xbf16> to vector<16x8xbf16>
    %39 = vector.extract_strided_slice %31 {offsets = [0, 16], sizes = [16, 8], strides = [1, 1]} : vector<16x32xbf16> to vector<16x8xbf16>
    %cst_19 = arith.constant dense<0.000000e+00> : vector<16x16xf32>
    %40 = tpu.matmul %38, %39, %cst_19 {dimension_numbers = #tpu.dot_dimension_numbers<[1], [1], [0], [0], [0, 0, 1, 0], [], []>} : vector<16x8xbf16>, vector<16x8xbf16>, vector<16x16xf32> -> vector<16x16xf32>
    %41 = vector.extract_strided_slice %25 {offsets = [0, 24], sizes = [16, 8], strides = [1, 1]} : vector<16x32xbf16> to vector<16x8xbf16>
    %42 = vector.extract_strided_slice %31 {offsets = [0, 24], sizes = [16, 8], strides = [1, 1]} : vector<16x32xbf16> to vector<16x8xbf16>
    %cst_20 = arith.constant dense<0.000000e+00> : vector<16x16xf32>
    %43 = tpu.matmul %41, %42, %cst_20 {dimension_numbers = #tpu.dot_dimension_numbers<[1], [1], [0], [0], [0, 0, 1, 0], [], []>} : vector<16x8xbf16>, vector<16x8xbf16>, vector<16x16xf32> -> vector<16x16xf32>
    %44 = vector.shape_cast %34 : vector<16x16xf32> to vector<1x16x16xf32>
    %45 = vector.shape_cast %37 : vector<16x16xf32> to vector<1x16x16xf32>
    %46 = vector.shape_cast %40 : vector<16x16xf32> to vector<1x16x16xf32>
    %47 = vector.shape_cast %43 : vector<16x16xf32> to vector<1x16x16xf32>
    %48 = tpu.concatenate %44, %45, %46, %47 in 0 : vector<1x16x16xf32>, vector<1x16x16xf32>, vector<1x16x16xf32>, vector<1x16x16xf32> -> vector<4x16x16xf32>
    %49 = vector.shape_cast %9 : vector<16x16xf32> to vector<1x16x16xf32>
    %50 = vector.broadcast %49 : vector<1x16x16xf32> to vector<4x16x16xf32>
    %51 = arith.addf %48, %50 : vector<4x16x16xf32>
    %cst_21 = arith.constant dense<0xFF800000> : vector<4x16xf32>
    %52 = vector.multi_reduction <maximumf>, %51, %cst_21 [2] : vector<4x16x16xf32> to vector<4x16xf32>
    %53 = vector.shape_cast %52 : vector<4x16xf32> to vector<4x16x1xf32>
    %54 = vector.broadcast %53 : vector<4x16x1xf32> to vector<4x16x16xf32>
    %55 = arith.subf %51, %54 : vector<4x16x16xf32>
    %56 = math.exp %55 : vector<4x16x16xf32>
    %cst_22 = arith.constant dense<0.000000e+00> : vector<4x16xf32>
    %57 = vector.multi_reduction <add>, %56, %cst_22 [2] : vector<4x16x16xf32> to vector<4x16xf32>
    %58 = vector.shape_cast %57 : vector<4x16xf32> to vector<4x16x1xf32>
    %59 = tpu.reciprocal %58 {approx = true} : vector<4x16x1xf32> -> vector<4x16x1xf32>
    %60 = vector.broadcast %59 : vector<4x16x1xf32> to vector<4x16x16xf32>
    %61 = arith.mulf %56, %60 : vector<4x16x16xf32>
    %62 = arith.truncf %61 : vector<4x16x16xf32> to vector<4x16x16xbf16>
    %cst_23 = arith.constant 0.000000e+00 : f32
    %63 = vector.broadcast %cst_23 : f32 to vector<16x32xf32>
    %c0_24 = arith.constant 0 : index
    %c0_25 = arith.constant 0 : index
    %64 = vector.load %arg9[%c0_24, %c0_25] : memref<16x32xf32, #tpu.memory_space<vmem>>, vector<16x32xf32>
    tpu.vector_store %arg9[%c0_24, %c0_25], %63 {strides = array<i32>} : memref<16x32xf32, #tpu.memory_space<vmem>>, vector<16x32xf32>,
    %c0_26 = arith.constant 0 : index
    %c0_27 = arith.constant 0 : index
    %c0_28 = arith.constant 0 : index
    %65 = vector.load %arg3[%c0_26, %c0_27, %c0_28] : memref<4x32x32xbf16, #tpu.memory_space<vmem>>, vector<1x32x32xbf16>
    %66 = vector.shape_cast %65 : vector<1x32x32xbf16> to vector<32x32xbf16>
    %cst_29 = arith.constant dense<0.000000e+00> : vector<16x32xf32>
    %67 = tpu.matmul %8, %66, %cst_29 {dimension_numbers = #tpu.dot_dimension_numbers<[1], [0], [0], [1], [0, 0, 1, 1], [], []>} : vector<16x32xbf16>, vector<32x32xbf16>, vector<16x32xf32> -> vector<16x32xf32>
    %68 = vector.extract_strided_slice %13 {offsets = [0, 0], sizes = [1, 32], strides = [1, 1]} : vector<4x32xf32> to vector<1x32xf32>
    %69 = vector.broadcast %68 : vector<1x32xf32> to vector<16x32xf32>
    %70 = arith.addf %67, %69 : vector<16x32xf32>
    %71 = arith.truncf %70 : vector<16x32xf32> to vector<16x32xbf16>
    %c0_30 = arith.constant 0 : index
    %c0_31 = arith.constant 0 : index
    %72 = vector.load %arg9[%c0_30, %c0_31] : memref<16x32xf32, #tpu.memory_space<vmem>>, vector<16x32xf32>
    %73 = vector.extract_strided_slice %62 {offsets = [0, 0, 0], sizes = [1, 16, 16], strides = [1, 1, 1]} : vector<4x16x16xbf16> to vector<1x16x16xbf16>
    %74 = vector.shape_cast %73 : vector<1x16x16xbf16> to vector<16x16xbf16>
    %cst_32 = arith.constant dense<0.000000e+00> : vector<16x32xf32>
    %75 = tpu.matmul %74, %71, %cst_32 {dimension_numbers = #tpu.dot_dimension_numbers<[1], [0], [0], [1], [0, 0, 1, 1], [], []>} : vector<16x16xbf16>, vector<16x32xbf16>, vector<16x32xf32> -> vector<16x32xf32>
    %76 = arith.addf %72, %75 : vector<16x32xf32>
    %c0_33 = arith.constant 0 : index
    %c0_34 = arith.constant 0 : index
    %77 = vector.load %arg9[%c0_33, %c0_34] : memref<16x32xf32, #tpu.memory_space<vmem>>, vector<16x32xf32>
    tpu.vector_store %arg9[%c0_33, %c0_34], %76 {strides = array<i32>} : memref<16x32xf32, #tpu.memory_space<vmem>>, vector<16x32xf32>,
    %c1_35 = arith.constant 1 : index
    %c0_36 = arith.constant 0 : index
    %c0_37 = arith.constant 0 : index
    %78 = vector.load %arg3[%c1_35, %c0_36, %c0_37] : memref<4x32x32xbf16, #tpu.memory_space<vmem>>, vector<1x32x32xbf16>
    %79 = vector.shape_cast %78 : vector<1x32x32xbf16> to vector<32x32xbf16>
    %cst_38 = arith.constant dense<0.000000e+00> : vector<16x32xf32>
    %80 = tpu.matmul %8, %79, %cst_38 {dimension_numbers = #tpu.dot_dimension_numbers<[1], [0], [0], [1], [0, 0, 1, 1], [], []>} : vector<16x32xbf16>, vector<32x32xbf16>, vector<16x32xf32> -> vector<16x32xf32>
    %81 = vector.extract_strided_slice %13 {offsets = [1, 0], sizes = [1, 32], strides = [1, 1]} : vector<4x32xf32> to vector<1x32xf32>
    %82 = vector.broadcast %81 : vector<1x32xf32> to vector<16x32xf32>
    %83 = arith.addf %80, %82 : vector<16x32xf32>
    %84 = arith.truncf %83 : vector<16x32xf32> to vector<16x32xbf16>
    %c0_39 = arith.constant 0 : index
    %c0_40 = arith.constant 0 : index
    %85 = vector.load %arg9[%c0_39, %c0_40] : memref<16x32xf32, #tpu.memory_space<vmem>>, vector<16x32xf32>
    %86 = vector.extract_strided_slice %62 {offsets = [1, 0, 0], sizes = [1, 16, 16], strides = [1, 1, 1]} : vector<4x16x16xbf16> to vector<1x16x16xbf16>
    %87 = vector.shape_cast %86 : vector<1x16x16xbf16> to vector<16x16xbf16>
    %cst_41 = arith.constant dense<0.000000e+00> : vector<16x32xf32>
    %88 = tpu.matmul %87, %84, %cst_41 {dimension_numbers = #tpu.dot_dimension_numbers<[1], [0], [0], [1], [0, 0, 1, 1], [], []>} : vector<16x16xbf16>, vector<16x32xbf16>, vector<16x32xf32> -> vector<16x32xf32>
    %89 = arith.addf %85, %88 : vector<16x32xf32>
    %c0_42 = arith.constant 0 : index
    %c0_43 = arith.constant 0 : index
    %90 = vector.load %arg9[%c0_42, %c0_43] : memref<16x32xf32, #tpu.memory_space<vmem>>, vector<16x32xf32>
    tpu.vector_store %arg9[%c0_42, %c0_43], %89 {strides = array<i32>} : memref<16x32xf32, #tpu.memory_space<vmem>>, vector<16x32xf32>,
    %c2_44 = arith.constant 2 : index
    %c0_45 = arith.constant 0 : index
    %c0_46 = arith.constant 0 : index
    %91 = vector.load %arg3[%c2_44, %c0_45, %c0_46] : memref<4x32x32xbf16, #tpu.memory_space<vmem>>, vector<1x32x32xbf16>
    %92 = vector.shape_cast %91 : vector<1x32x32xbf16> to vector<32x32xbf16>
    %cst_47 = arith.constant dense<0.000000e+00> : vector<16x32xf32>
    %93 = tpu.matmul %8, %92, %cst_47 {dimension_numbers = #tpu.dot_dimension_numbers<[1], [0], [0], [1], [0, 0, 1, 1], [], []>} : vector<16x32xbf16>, vector<32x32xbf16>, vector<16x32xf32> -> vector<16x32xf32>
    %94 = vector.extract_strided_slice %13 {offsets = [2, 0], sizes = [1, 32], strides = [1, 1]} : vector<4x32xf32> to vector<1x32xf32>
    %95 = vector.broadcast %94 : vector<1x32xf32> to vector<16x32xf32>
    %96 = arith.addf %93, %95 : vector<16x32xf32>
    %97 = arith.truncf %96 : vector<16x32xf32> to vector<16x32xbf16>
    %c0_48 = arith.constant 0 : index
    %c0_49 = arith.constant 0 : index
    %98 = vector.load %arg9[%c0_48, %c0_49] : memref<16x32xf32, #tpu.memory_space<vmem>>, vector<16x32xf32>
    %99 = vector.extract_strided_slice %62 {offsets = [2, 0, 0], sizes = [1, 16, 16], strides = [1, 1, 1]} : vector<4x16x16xbf16> to vector<1x16x16xbf16>
    %100 = vector.shape_cast %99 : vector<1x16x16xbf16> to vector<16x16xbf16>
    %cst_50 = arith.constant dense<0.000000e+00> : vector<16x32xf32>
    %101 = tpu.matmul %100, %97, %cst_50 {dimension_numbers = #tpu.dot_dimension_numbers<[1], [0], [0], [1], [0, 0, 1, 1], [], []>} : vector<16x16xbf16>, vector<16x32xbf16>, vector<16x32xf32> -> vector<16x32xf32>
    %102 = arith.addf %98, %101 : vector<16x32xf32>
    %c0_51 = arith.constant 0 : index
    %c0_52 = arith.constant 0 : index
    %103 = vector.load %arg9[%c0_51, %c0_52] : memref<16x32xf32, #tpu.memory_space<vmem>>, vector<16x32xf32>
    tpu.vector_store %arg9[%c0_51, %c0_52], %102 {strides = array<i32>} : memref<16x32xf32, #tpu.memory_space<vmem>>, vector<16x32xf32>,
    %c3 = arith.constant 3 : index
    %c0_53 = arith.constant 0 : index
    %c0_54 = arith.constant 0 : index
    %104 = vector.load %arg3[%c3, %c0_53, %c0_54] : memref<4x32x32xbf16, #tpu.memory_space<vmem>>, vector<1x32x32xbf16>
    %105 = vector.shape_cast %104 : vector<1x32x32xbf16> to vector<32x32xbf16>
    %cst_55 = arith.constant dense<0.000000e+00> : vector<16x32xf32>
    %106 = tpu.matmul %8, %105, %cst_55 {dimension_numbers = #tpu.dot_dimension_numbers<[1], [0], [0], [1], [0, 0, 1, 1], [], []>} : vector<16x32xbf16>, vector<32x32xbf16>, vector<16x32xf32> -> vector<16x32xf32>
    %107 = vector.extract_strided_slice %13 {offsets = [3, 0], sizes = [1, 32], strides = [1, 1]} : vector<4x32xf32> to vector<1x32xf32>
    %108 = vector.broadcast %107 : vector<1x32xf32> to vector<16x32xf32>
    %109 = arith.addf %106, %108 : vector<16x32xf32>
    %110 = arith.truncf %109 : vector<16x32xf32> to vector<16x32xbf16>
    %c0_56 = arith.constant 0 : index
    %c0_57 = arith.constant 0 : index
    %111 = vector.load %arg9[%c0_56, %c0_57] : memref<16x32xf32, #tpu.memory_space<vmem>>, vector<16x32xf32>
    %112 = vector.extract_strided_slice %62 {offsets = [3, 0, 0], sizes = [1, 16, 16], strides = [1, 1, 1]} : vector<4x16x16xbf16> to vector<1x16x16xbf16>
    %113 = vector.shape_cast %112 : vector<1x16x16xbf16> to vector<16x16xbf16>
    %cst_58 = arith.constant dense<0.000000e+00> : vector<16x32xf32>
    %114 = tpu.matmul %113, %110, %cst_58 {dimension_numbers = #tpu.dot_dimension_numbers<[1], [0], [0], [1], [0, 0, 1, 1], [], []>} : vector<16x16xbf16>, vector<16x32xbf16>, vector<16x32xf32> -> vector<16x32xf32>
    %115 = arith.addf %111, %114 : vector<16x32xf32>
    %c0_59 = arith.constant 0 : index
    %c0_60 = arith.constant 0 : index
    %116 = vector.load %arg9[%c0_59, %c0_60] : memref<16x32xf32, #tpu.memory_space<vmem>>, vector<16x32xf32>
    tpu.vector_store %arg9[%c0_59, %c0_60], %115 {strides = array<i32>} : memref<16x32xf32, #tpu.memory_space<vmem>>, vector<16x32xf32>,
    %c0_61 = arith.constant 0 : index
    %c0_62 = arith.constant 0 : index
    %117 = vector.load %arg9[%c0_61, %c0_62] : memref<16x32xf32, #tpu.memory_space<vmem>>, vector<16x32xf32>
    %118 = vector.broadcast %14 : vector<1x32xf32> to vector<16x32xf32>
    %119 = arith.addf %117, %118 : vector<16x32xf32>
    %120 = arith.addf %119, %1 : vector<16x32xf32>
    %cst_63 = arith.constant dense<0.000000e+00> : vector<16xf32>
    %121 = vector.multi_reduction <add>, %120, %cst_63 [1] : vector<16x32xf32> to vector<16xf32>
    %122 = vector.shape_cast %121 : vector<16xf32> to vector<16x1xf32>
    %cst_64 = arith.constant 3.200000e+01 : f32
    %123 = vector.broadcast %cst_64 : f32 to vector<16x1xf32>
    %124 = arith.divf %122, %123 : vector<16x1xf32>
    %125 = vector.broadcast %124 : vector<16x1xf32> to vector<16x32xf32>
    %126 = arith.subf %120, %125 : vector<16x32xf32>
    %127 = arith.mulf %126, %126 : vector<16x32xf32>
    %cst_65 = arith.constant dense<0.000000e+00> : vector<16xf32>
    %128 = vector.multi_reduction <add>, %127, %cst_65 [1] : vector<16x32xf32> to vector<16xf32>
    %129 = vector.shape_cast %128 : vector<16xf32> to vector<16x1xf32>
    %cst_66 = arith.constant 3.200000e+01 : f32
    %130 = vector.broadcast %cst_66 : f32 to vector<16x1xf32>
    %131 = arith.divf %129, %130 : vector<16x1xf32>
    %cst_67 = arith.constant 9.99999974E-6 : f32
    %132 = vector.broadcast %cst_67 : f32 to vector<16x1xf32>
    %133 = arith.addf %131, %132 : vector<16x1xf32>
    %134 = math.rsqrt %133 : vector<16x1xf32>
    %135 = vector.broadcast %124 : vector<16x1xf32> to vector<16x32xf32>
    %136 = arith.subf %120, %135 : vector<16x32xf32>
    %137 = vector.broadcast %134 : vector<16x1xf32> to vector<16x32xf32>
    %138 = arith.mulf %136, %137 : vector<16x32xf32>
    %139 = vector.broadcast %15 : vector<1x32xf32> to vector<16x32xf32>
    %140 = arith.mulf %138, %139 : vector<16x32xf32>
    %141 = vector.broadcast %16 : vector<1x32xf32> to vector<16x32xf32>
    %142 = arith.addf %140, %141 : vector<16x32xf32>
    %143 = arith.truncf %142 : vector<16x32xf32> to vector<16x32xbf16>
    %c0_68 = arith.constant 0 : index
    %c0_69 = arith.constant 0 : index
    %144 = vector.load %arg4[%c0_68, %c0_69] : memref<32x128xbf16, #tpu.memory_space<vmem>>, vector<32x128xbf16>
    %cst_70 = arith.constant dense<0.000000e+00> : vector<16x128xf32>
    %145 = tpu.matmul %143, %144, %cst_70 {dimension_numbers = #tpu.dot_dimension_numbers<[1], [0], [0], [1], [0, 0, 1, 1], [], []>} : vector<16x32xbf16>, vector<32x128xbf16>, vector<16x128xf32> -> vector<16x128xf32>
    %c0_71 = arith.constant 0 : index
    %c0_72 = arith.constant 0 : index
    %146 = vector.load %arg7[%c0_71, %c0_72] : memref<1x128xf32, #tpu.memory_space<vmem>>, vector<1x128xf32>
    %147 = vector.broadcast %146 : vector<1x128xf32> to vector<16x128xf32>
    %148 = arith.addf %145, %147 : vector<16x128xf32>
    %cst_73 = arith.constant 0.000000e+00 : f32
    %149 = vector.broadcast %cst_73 : f32 to vector<16x128xf32>
    %150 = arith.maximumf %148, %149 : vector<16x128xf32>
    %151 = arith.truncf %150 : vector<16x128xf32> to vector<16x128xbf16>
    %c0_74 = arith.constant 0 : index
    %c0_75 = arith.constant 0 : index
    %152 = vector.load %arg5[%c0_74, %c0_75] : memref<128x32xbf16, #tpu.memory_space<vmem>>, vector<128x32xbf16>
    %cst_76 = arith.constant dense<0.000000e+00> : vector<16x32xf32>
    %153 = tpu.matmul %151, %152, %cst_76 {dimension_numbers = #tpu.dot_dimension_numbers<[1], [0], [0], [1], [0, 0, 1, 1], [], []>} : vector<16x128xbf16>, vector<128x32xbf16>, vector<16x32xf32> -> vector<16x32xf32>
    %154 = vector.broadcast %17 : vector<1x32xf32> to vector<16x32xf32>
    %155 = arith.addf %153, %154 : vector<16x32xf32>
    %156 = arith.addf %155, %142 : vector<16x32xf32>
    %cst_77 = arith.constant dense<0.000000e+00> : vector<16xf32>
    %157 = vector.multi_reduction <add>, %156, %cst_77 [1] : vector<16x32xf32> to vector<16xf32>
    %158 = vector.shape_cast %157 : vector<16xf32> to vector<16x1xf32>
    %cst_78 = arith.constant 3.200000e+01 : f32
    %159 = vector.broadcast %cst_78 : f32 to vector<16x1xf32>
    %160 = arith.divf %158, %159 : vector<16x1xf32>
    %161 = vector.broadcast %160 : vector<16x1xf32> to vector<16x32xf32>
    %162 = arith.subf %156, %161 : vector<16x32xf32>
    %163 = arith.mulf %162, %162 : vector<16x32xf32>
    %cst_79 = arith.constant dense<0.000000e+00> : vector<16xf32>
    %164 = vector.multi_reduction <add>, %163, %cst_79 [1] : vector<16x32xf32> to vector<16xf32>
    %165 = vector.shape_cast %164 : vector<16xf32> to vector<16x1xf32>
    %cst_80 = arith.constant 3.200000e+01 : f32
    %166 = vector.broadcast %cst_80 : f32 to vector<16x1xf32>
    %167 = arith.divf %165, %166 : vector<16x1xf32>
    %cst_81 = arith.constant 9.99999974E-6 : f32
    %168 = vector.broadcast %cst_81 : f32 to vector<16x1xf32>
    %169 = arith.addf %167, %168 : vector<16x1xf32>
    %170 = math.rsqrt %169 : vector<16x1xf32>
    %171 = vector.broadcast %160 : vector<16x1xf32> to vector<16x32xf32>
    %172 = arith.subf %156, %171 : vector<16x32xf32>
    %173 = vector.broadcast %170 : vector<16x1xf32> to vector<16x32xf32>
    %174 = arith.mulf %172, %173 : vector<16x32xf32>
    %175 = vector.broadcast %18 : vector<1x32xf32> to vector<16x32xf32>
    %176 = arith.mulf %174, %175 : vector<16x32xf32>
    %177 = vector.broadcast %19 : vector<1x32xf32> to vector<16x32xf32>
    %178 = arith.addf %176, %177 : vector<16x32xf32>
    %c0_82 = arith.constant 0 : index
    %c0_83 = arith.constant 0 : index
    %179 = vector.load %arg8[%c0_82, %c0_83] : memref<16x32xf32, #tpu.memory_space<vmem>>, vector<16x32xf32>
    tpu.vector_store %arg8[%c0_82, %c0_83], %178 {strides = array<i32>} : memref<16x32xf32, #tpu.memory_space<vmem>>, vector<16x32xf32>,
    return
  }
}

</mosaic_0001>

<llo_original>
// kernel: tpu_custom_call.1
$region0: #{tpu_custom_call.1}
  #allocation0 [shape = 'u32[]', space=smem, size = 0x4, offset = 0x4, fixed_abs, tag = 'smem constant byte address 0x4 - core index']
  #allocation1 [shape = 'u32[72,128]{1,0:T(1,128)}', space=vmem, size = 0x9000, scoped, tag = 'internal scratch']
  #allocation2 [shape = 'f32[16,32]{1,0:T(8,128)}', space=vmem, size = 0x2000, scoped, tag = 'scratch operand']
  %s0 = inlined_call_operand.hbm [shape: f32[3,16,32], index: 0, kind: input, shape index: {}]
  %s1 = inlined_call_operand.vmem [shape: f32[16,16], index: 1, kind: input, shape index: {}]
  %s2 = inlined_call_operand.hbm [shape: bf16[2,32,32], index: 2, kind: input, shape index: {}]
  %s3 = inlined_call_operand.vmem [shape: bf16[4,32,32], index: 3, kind: input, shape index: {}]
  %s4 = inlined_call_operand.hbm [shape: bf16[32,128], index: 4, kind: input, shape index: {}]
  %s5 = inlined_call_operand.vmem [shape: bf16[128,32], index: 5, kind: input, shape index: {}]
  %s6 = inlined_call_operand.hbm [shape: f32[12,32], index: 6, kind: input, shape index: {}]
  %s7 = inlined_call_operand.vmem [shape: f32[1,128], index: 7, kind: input, shape index: {}]
  %s8 = inlined_call_operand.hbm [shape: f32[16,32], index: 8, kind: output, shape index: {}]
  %s9 = sld [smem:[#allocation0]]
  $region58: #{tpu_custom_call.1} parent=0
    _
  %s11 = ssub.s32 1, %s9
  %s12 = scalar_select 0, %s11, %s9
  $region1: #{tpu_custom_call.1} parent=0
    #allocation3 [shape = 'u8[24576]{0}', space=vmem, size = 0x6000, scoped, tag = 'input window, operand 0, single buffered']
    #allocation4 [shape = 's32[1]{0}', space=sflag, size = 0x4, scoped, tag = 'scoped memory for tpu_custom_call.1']
    #allocation5 [shape = 's32[1]{0}', space=sflag, size = 0x4, scoped, tag = 'scoped memory for tpu_custom_call.1']
    #allocation6 [shape = 'u8[16384]{0}', space=vmem, size = 0x4000, scoped, tag = 'input window, operand 2, single buffered']
    #allocation7 [shape = 's32[1]{0}', space=sflag, size = 0x4, scoped, tag = 'scoped memory for tpu_custom_call.1']
    #allocation8 [shape = 'u8[8192]{0}', space=vmem, size = 0x2000, scoped, tag = 'input window, operand 4, single buffered']
    #allocation9 [shape = 'u8[8192]{0}', space=vmem, size = 0x2000, scoped, tag = 'input window, operand 6, single buffered']
    #allocation10 [shape = 's32[1]{0}', space=sflag, size = 0x4, scoped, tag = 'scoped memory for tpu_custom_call.1']
    #allocation11 [shape = 'u8[8192]{0}', space=vmem, size = 0x2000, scoped, tag = 'output window, operand 0, single buffered']
    %13 = vsyncpa [#allocation4], 0
    %14 = vsyncpa [#allocation7], 0
    %15 = vsyncpa [#allocation10], 0
    %16 = vsyncpa [#allocation5], 0
    // Predicated region
    $region2: #{tpu_custom_call.1} parent=1 // pred_check
      _
    $region3: #{tpu_custom_call.1} parent=1 // pred_check_branch
      %18 = sbr.rel (0) target = $region5
    $region4: #{tpu_custom_call.1} parent=1 // pred_region
      %20 = vsyncadd [#allocation4], 0
      %s21 = sshll.u32 %s0, 4
      %s22 = int_to_ptr.hbm [resolvable:$true] %s21
      %s23 = sshll.u32 [#allocation3], 4
      %s24 = int_to_ptr.vmem [resolvable:$true] %s23
      %29 = dma.hbm_to_vmem [thread:$0]  %s22, 768, %s24, [#allocation4], 128, 128, 8
    $region5: #{tpu_custom_call.1} parent=1 // pred_fallthru
      _
    // Predicated region
    $region6: #{tpu_custom_call.1} parent=1 // pred_check
      _
    $region7: #{tpu_custom_call.1} parent=1 // pred_check_branch
      %31 = sbr.rel (0) target = $region9
    $region8: #{tpu_custom_call.1} parent=1 // pred_region
      _
    $region9: #{tpu_custom_call.1} parent=1 // pred_fallthru
      _
    // Predicated region
    $region10: #{tpu_custom_call.1} parent=1 // pred_check
      _
    $region11: #{tpu_custom_call.1} parent=1 // pred_check_branch
      %33 = sbr.rel (0) target = $region13
    $region12: #{tpu_custom_call.1} parent=1 // pred_region
      %35 = vsyncadd [#allocation7], 0
      %s36 = sshll.u32 %s2, 4
      %s37 = int_to_ptr.hbm [resolvable:$true] %s36
      %s38 = sshll.u32 [#allocation6], 4
      %s39 = int_to_ptr.vmem [resolvable:$true] %s38
      %44 = dma.hbm_to_vmem [thread:$0]  %s37, 512, %s39, [#allocation7], 64, 64, 4
    $region13: #{tpu_custom_call.1} parent=1 // pred_fallthru
      _
    // Predicated region
    $region14: #{tpu_custom_call.1} parent=1 // pred_check
      _
    $region15: #{tpu_custom_call.1} parent=1 // pred_check_branch
      %46 = sbr.rel (0) target = $region17
    $region16: #{tpu_custom_call.1} parent=1 // pred_region
      _
    $region17: #{tpu_custom_call.1} parent=1 // pred_fallthru
      _
    // Predicated region
    $region18: #{tpu_custom_call.1} parent=1 // pred_check
      _
    $region19: #{tpu_custom_call.1} parent=1 // pred_check_branch
      %48 = sbr.rel (0) target = $region21
    $region20: #{tpu_custom_call.1} parent=1 // pred_region
      %50 = vsyncadd [#allocation7], 0
      %s51 = sshll.u32 %s4, 4
      %s52 = int_to_ptr.hbm [resolvable:$true] %s51
      %s53 = sshll.u32 [#allocation8], 4
      %s54 = int_to_ptr.vmem [resolvable:$true] %s53
      %59 = dma.hbm_to_vmem [thread:$0]  %s52, 256, %s54, [#allocation7], 64, 64, 4
    $region21: #{tpu_custom_call.1} parent=1 // pred_fallthru
      _
    // Predicated region
    $region22: #{tpu_custom_call.1} parent=1 // pred_check
      _
    $region23: #{tpu_custom_call.1} parent=1 // pred_check_branch
      %61 = sbr.rel (0) target = $region25
    $region24: #{tpu_custom_call.1} parent=1 // pred_region
      _
    $region25: #{tpu_custom_call.1} parent=1 // pred_fallthru
      _
    // Predicated region
    $region26: #{tpu_custom_call.1} parent=1 // pred_check
      _
    $region27: #{tpu_custom_call.1} parent=1 // pred_check_branch
      %63 = sbr.rel (0) target = $region29
    $region28: #{tpu_custom_call.1} parent=1 // pred_region
      %65 = vsyncadd [#allocation10], 0
      %s66 = sshll.u32 %s6, 4
      %s67 = int_to_ptr.hbm [resolvable:$true] %s66
      %s68 = sshll.u32 [#allocation9], 4
      %s69 = int_to_ptr.vmem [resolvable:$true] %s68
      %74 = dma.hbm_to_vmem [thread:$0]  %s67, 256, %s69, [#allocation10], 128, 128, 8
    $region29: #{tpu_custom_call.1} parent=1 // pred_fallthru
      _
    // Predicated region
    $region30: #{tpu_custom_call.1} parent=1 // pred_check
      _
    $region31: #{tpu_custom_call.1} parent=1 // pred_check_branch
      %76 = sbr.rel (0) target = $region33
    $region32: #{tpu_custom_call.1} parent=1 // pred_region
      _
    $region33: #{tpu_custom_call.1} parent=1 // pred_fallthru
      _
    // Predicated region
    $region34: #{tpu_custom_call.1} parent=1 // pred_check
      _
    $region35: #{tpu_custom_call.1} parent=1 // pred_check_branch
      %78 = sbr.rel (0) target = $region37
    $region36: #{tpu_custom_call.1} parent=1 // pred_region
      %80 = dma.done [#allocation4], 768
    $region37: #{tpu_custom_call.1} parent=1 // pred_fallthru
      _
    // Predicated region
    $region38: #{tpu_custom_call.1} parent=1 // pred_check
      _
    $region39: #{tpu_custom_call.1} parent=1 // pred_check_branch
      %82 = sbr.rel (0) target = $region41
    $region40: #{tpu_custom_call.1} parent=1 // pred_region
      %84 = dma.done [#allocation7], 512
    $region41: #{tpu_custom_call.1} parent=1 // pred_fallthru
      _
    // Predicated region
    $region42: #{tpu_custom_call.1} parent=1 // pred_check
      _
    $region43: #{tpu_custom_call.1} parent=1 // pred_check_branch
      %86 = sbr.rel (0) target = $region45
    $region44: #{tpu_custom_call.1} parent=1 // pred_region
      %88 = dma.done [#allocation7], 256
    $region45: #{tpu_custom_call.1} parent=1 // pred_fallthru
      _
    // Predicated region
    $region46: #{tpu_custom_call.1} parent=1 // pred_check
      _
    $region47: #{tpu_custom_call.1} parent=1 // pred_check_branch
      %90 = sbr.rel (0) target = $region49
    $region48: #{tpu_custom_call.1} parent=1 // pred_region
      %92 = dma.done [#allocation10], 256
    $region49: #{tpu_custom_call.1} parent=1 // pred_fallthru
      _
    %v94 = vld [vmem:[#allocation3] sm:$0xff]
    %v95 = vld [vmem:[#allocation3 + $0x8] sm:$0xff]
    %s96 = scalar_lea.vmem [#allocation3], 16
    %v97 = vld [vmem:[%s96] sm:$0xff]
    %v98 = vld [vmem:[%s96 + $0x8] sm:$0xff]
    %s99 = scalar_lea.vmem [#allocation3], 32
    %v100 = vld [vmem:[%s99] sm:$0xff]
    %v101 = vld [vmem:[%s99 + $0x8] sm:$0xff]
    %v102 = vpack.c.bf16 %v95, %v94
    %v103 = vpack.c.bf16 %v98, %v97
    %v104 = vpack.c.bf16 %v101, %v100
    %v105 = vld [vmem:[%s1] sm:$0xff]
    %v106 = vld [vmem:[%s1 + $0x8] sm:$0xff]
    %v107 = vld [vmem:[#allocation9] sm:$0xff]
    %v108 = vld [vmem:[#allocation9 + $0x8] sm:$0xf]
    %v109 = vld [vmem:[#allocation6] sm:$0xf]
    %v110 = vld [vmem:[#allocation6 + $0x4] sm:$0xf]
    %v111 = vld [vmem:[#allocation6 + $0x8] sm:$0xf]
    %v112 = vld [vmem:[#allocation6 + $0xc] sm:$0xf]
    %v113 = vperm.slane %v107, 0
    %v118 = vunpack.c.l.b16 %v109
    %v119 = vunpack.c.l.b16 %v110
    %v120 = vunpack.c.l.b16 %v111
    %v121 = vunpack.c.l.b16 %v112
    %v122 = vpack.c.b16 %v119, %v118
    %v123 = vpack.c.b16 %v121, %v120
    %vm126 = vcmask 261120
    %v128 = vsel %vm126, %v102, 0
    %130 = vmatpush.bf16.msra.mxu0 0
    %131 = vmatpush.bf16.msra.mxu0 0
    %132 = vmatpush.bf16.msra.mxu0 0
    %133 = vmatpush.bf16.msra.mxu0 0
    %134 = vmatpush.bf16.msra.mxu0 0
    %135 = vmatpush.bf16.msra.mxu0 0
    %136 = vmatpush.bf16.msra.mxu0 %v123
    %137 = vmatpush.bf16.msra.mxu0 %v122
    %138 = vmatmul.bf16.gmra.mxu0 %v128
    %v139 = vpop.f32.mrf.mxu0
    %v140 = vadd.f32 %v113, %v139
    %v141 = vpop.f32.mrf.mxu0
    %v142 = vadd.f32 %v113, %v141
    %143 = vdwg.mxu0
    %v144 = vpack.c.bf16 %v140, %v140
    %v145 = vpack.c.bf16 %v142, %v142
    %s146 = scalar_lea.vmem [#allocation6], 16
    %v147 = vld [vmem:[%s146] sm:$0xf]
    %v148 = vld [vmem:[%s146 + $0x4] sm:$0xf]
    %v149 = vld [vmem:[%s146 + $0x8] sm:$0xf]
    %v150 = vld [vmem:[%s146 + $0xc] sm:$0xf]
    %v151 = vperm.slane %v107, 1
    %v156 = vunpack.c.l.b16 %v147
    %v157 = vunpack.c.l.b16 %v148
    %v158 = vunpack.c.l.b16 %v149
    %v159 = vunpack.c.l.b16 %v150
    %v160 = vpack.c.b16 %v157, %v156
    %v161 = vpack.c.b16 %v159, %v158
    %v165 = vsel %vm126, %v103, 0
    %167 = vmatpush.bf16.msra.mxu0 0
    %168 = vmatpush.bf16.msra.mxu0 0
    %169 = vmatpush.bf16.msra.mxu0 0
    %170 = vmatpush.bf16.msra.mxu0 0
    %171 = vmatpush.bf16.msra.mxu0 0
    %172 = vmatpush.bf16.msra.mxu0 0
    %173 = vmatpush.bf16.msra.mxu0 %v161
    %174 = vmatpush.bf16.msra.mxu0 %v160
    %175 = vmatmul.bf16.gmra.mxu0 %v165
    %v176 = vpop.f32.mrf.mxu0
    %v177 = vadd.f32 %v151, %v176
    %v178 = vpop.f32.mrf.mxu0
    %v179 = vadd.f32 %v151, %v178
    %180 = vdwg.mxu0
    %v181 = vpack.c.bf16 %v177, %v177
    %v182 = vpack.c.bf16 %v179, %v179
    %v185 = vunpack.c.l.b16 %v144
    %v186 = vunpack.c.l.b16 %v145
    %v187 = vpack.c.b16 %v186, %v185
    %v190 = vunpack.c.l.b16 %v181
    %v191 = vunpack.c.l.b16 %v182
    %v192 = vpack.c.b16 %v191, %v190
    %vm193 = vcmask 64512
    %v195 = vsel %vm193, %v187, 0
    %v198 = vsel %vm193, %v192, 0
    %200 = vmatpush.bf16.xpose.msra.mxu0 0
    %201 = vmatpush.bf16.xpose.msra.mxu0 0
    %202 = vmatpush.bf16.xpose.msra.mxu0 0
    %203 = vmatpush.bf16.xpose.msra.mxu0 0
    %204 = vmatpush.bf16.xpose.msra.mxu0 0
    %205 = vmatpush.bf16.xpose.msra.mxu0 0
    %206 = vmatpush.bf16.xpose.msra.mxu0 0
    %207 = vmatpush.bf16.xpose.msra.mxu0 %v198
    %208 = vmatmul.bf16.gmra.mxu0 %v195
    %v209 = vpop.f32.mrf.mxu0
    %v210 = vadd.f32 0.0, %v209
    %v211 = vpop.f32.mrf.mxu0
    %v212 = vadd.f32 0.0, %v211
    %213 = vdwg.mxu0
    %214 = vrot.lane.b32.xlu0 %v187, 120
    %v215 = vpop.permute.xlu0 %214
    %216 = vrot.lane.b32.xlu0 %v192, 120
    %v217 = vpop.permute.xlu0 %216
    %v219 = vsel %vm193, %v215, 0
    %v222 = vsel %vm193, %v217, 0
    %224 = vmatpush.bf16.xpose.msra.mxu0 0
    %225 = vmatpush.bf16.xpose.msra.mxu0 0
    %226 = vmatpush.bf16.xpose.msra.mxu0 0
    %227 = vmatpush.bf16.xpose.msra.mxu0 0
    %228 = vmatpush.bf16.xpose.msra.mxu0 0
    %229 = vmatpush.bf16.xpose.msra.mxu0 0
    %230 = vmatpush.bf16.xpose.msra.mxu0 0
    %231 = vmatpush.bf16.xpose.msra.mxu0 %v222
    %232 = vmatmul.bf16.gmra.mxu0 %v219
    %v233 = vpop.f32.mrf.mxu0
    %v234 = vadd.f32 0.0, %v233
    %v235 = vpop.f32.mrf.mxu0
    %v236 = vadd.f32 0.0, %v235
    %237 = vdwg.mxu0
    %238 = vrot.lane.b32.xlu0 %v187, 112
    %v239 = vpop.permute.xlu0 %238
    %240 = vrot.lane.b32.xlu0 %v192, 112
    %v241 = vpop.permute.xlu0 %240
    %v243 = vsel %vm193, %v239, 0
    %v246 = vsel %vm193, %v241, 0
    %248 = vmatpush.bf16.xpose.msra.mxu0 0
    %249 = vmatpush.bf16.xpose.msra.mxu0 0
    %250 = vmatpush.bf16.xpose.msra.mxu0 0
    %251 = vmatpush.bf16.xpose.msra.mxu0 0
    %252 = vmatpush.bf16.xpose.msra.mxu0 0
    %253 = vmatpush.bf16.xpose.msra.mxu0 0
    %254 = vmatpush.bf16.xpose.msra.mxu0 0
    %255 = vmatpush.bf16.xpose.msra.mxu0 %v246
    %256 = vmatmul.bf16.gmra.mxu0 %v243
    %v257 = vpop.f32.mrf.mxu0
    %v258 = vadd.f32 0.0, %v257
    %v259 = vpop.f32.mrf.mxu0
    %v260 = vadd.f32 0.0, %v259
    %261 = vdwg.mxu0
    %262 = vrot.lane.b32.xlu0 %v187, 104
    %v263 = vpop.permute.xlu0 %262
    %264 = vrot.lane.b32.xlu0 %v192, 104
    %v265 = vpop.permute.xlu0 %264
    %v267 = vsel %vm193, %v263, 0
    %v270 = vsel %vm193, %v265, 0
    %272 = vmatpush.bf16.xpose.msra.mxu0 0
    %273 = vmatpush.bf16.xpose.msra.mxu0 0
    %274 = vmatpush.bf16.xpose.msra.mxu0 0
    %275 = vmatpush.bf16.xpose.msra.mxu0 0
    %276 = vmatpush.bf16.xpose.msra.mxu0 0
    %277 = vmatpush.bf16.xpose.msra.mxu0 0
    %278 = vmatpush.bf16.xpose.msra.mxu0 0
    %279 = vmatpush.bf16.xpose.msra.mxu0 %v270
    %280 = vmatmul.bf16.gmra.mxu0 %v267
    %v281 = vpop.f32.mrf.mxu0
    %v282 = vadd.f32 0.0, %v281
    %v283 = vpop.f32.mrf.mxu0
    %v284 = vadd.f32 0.0, %v283
    %285 = vdwg.mxu0
    %v286 = vadd.f32 %v210, %v105
    %v287 = vadd.f32 %v212, %v106
    %v288 = vadd.f32 %v234, %v105
    %v289 = vadd.f32 %v236, %v106
    %v290 = vadd.f32 %v258, %v105
    %v291 = vadd.f32 %v260, %v106
    %v292 = vadd.f32 %v282, %v105
    %v293 = vadd.f32 %v284, %v106
    %vm294 = vcmask 130048
    %v295 = vsel %vm294, %v286, -inf
    %296 = vmax.xlane.f32.xlu0 %v295
    %v297 = vpop.xlane.xlu0 %296
    %v298 = vsel %vm294, %v287, -inf
    %299 = vmax.xlane.f32.xlu0 %v298
    %v300 = vpop.xlane.xlu0 %299
    %v301 = vsel %vm294, %v288, -inf
    %302 = vmax.xlane.f32.xlu0 %v301
    %v303 = vpop.xlane.xlu0 %302
    %v304 = vsel %vm294, %v289, -inf
    %305 = vmax.xlane.f32.xlu0 %v304
    %v306 = vpop.xlane.xlu0 %305
    %v307 = vsel %vm294, %v290, -inf
    %308 = vmax.xlane.f32.xlu0 %v307
    %v309 = vpop.xlane.xlu0 %308
    %v310 = vsel %vm294, %v291, -inf
    %311 = vmax.xlane.f32.xlu0 %v310
    %v312 = vpop.xlane.xlu0 %311
    %v313 = vsel %vm294, %v292, -inf
    %314 = vmax.xlane.f32.xlu0 %v313
    %v315 = vpop.xlane.xlu0 %314
    %v316 = vsel %vm294, %v293, -inf
    %317 = vmax.xlane.f32.xlu0 %v316
    %v318 = vpop.xlane.xlu0 %317
    %v319 = vsub.f32 %v286, %v297
    %v320 = vsub.f32 %v287, %v300
    %v321 = vsub.f32 %v288, %v303
    %v322 = vsub.f32 %v289, %v306
    %v323 = vsub.f32 %v290, %v309
    %v324 = vsub.f32 %v291, %v312
    %v325 = vsub.f32 %v292, %v315
    %v326 = vsub.f32 %v293, %v318
    %v327 = vmul.f32 %v319, 1.442695
    %v328 = vpow.pop %v327
    %v329 = vmul.f32 %v320, 1.442695
    %v330 = vpow.pop %v329
    %v331 = vmul.f32 %v321, 1.442695
    %v332 = vpow.pop %v331
    %v333 = vmul.f32 %v322, 1.442695
    %v334 = vpow.pop %v333
    %v335 = vmul.f32 %v323, 1.442695
    %v336 = vpow.pop %v335
    %v337 = vmul.f32 %v324, 1.442695
    %v338 = vpow.pop %v337
    %v339 = vmul.f32 %v325, 1.442695
    %v340 = vpow.pop %v339
    %v341 = vmul.f32 %v326, 1.442695
    %v342 = vpow.pop %v341
    %v343 = vsel %vm294, %v328, 0.0
    %344 = vadd.xlane.f32.xlu0 %v343
    %v345 = vpop.xlane.xlu0 %344
    %v346 = vsel %vm294, %v330, 0.0
    %347 = vadd.xlane.f32.xlu0 %v346
    %v348 = vpop.xlane.xlu0 %347
    %v349 = vsel %vm294, %v332, 0.0
    %350 = vadd.xlane.f32.xlu0 %v349
    %v351 = vpop.xlane.xlu0 %350
    %v352 = vsel %vm294, %v334, 0.0
    %353 = vadd.xlane.f32.xlu0 %v352
    %v354 = vpop.xlane.xlu0 %353
    %v355 = vsel %vm294, %v336, 0.0
    %356 = vadd.xlane.f32.xlu0 %v355
    %v357 = vpop.xlane.xlu0 %356
    %v358 = vsel %vm294, %v338, 0.0
    %359 = vadd.xlane.f32.xlu0 %v358
    %v360 = vpop.xlane.xlu0 %359
    %v361 = vsel %vm294, %v340, 0.0
    %362 = vadd.xlane.f32.xlu0 %v361
    %v363 = vpop.xlane.xlu0 %362
    %v364 = vsel %vm294, %v342, 0.0
    %365 = vadd.xlane.f32.xlu0 %v364
    %v366 = vpop.xlane.xlu0 %365
    %v367 = vrcp.pop %v345
    %v368 = vrcp.pop %v348
    %v369 = vrcp.pop %v351
    %v370 = vrcp.pop %v354
    %v371 = vrcp.pop %v357
    %v372 = vrcp.pop %v360
    %v373 = vrcp.pop %v363
    %v374 = vrcp.pop %v366
    %v375 = vmul.f32 %v328, %v367
    %v376 = vmul.f32 %v330, %v368
    %v377 = vmul.f32 %v332, %v369
    %v378 = vmul.f32 %v334, %v370
    %v379 = vmul.f32 %v336, %v371
    %v380 = vmul.f32 %v338, %v372
    %v381 = vmul.f32 %v340, %v373
    %v382 = vmul.f32 %v342, %v374
    %v383 = vpack.c.bf16 %v375, %v375
    %v384 = vpack.c.bf16 %v376, %v376
    %v385 = vpack.c.bf16 %v377, %v377
    %v386 = vpack.c.bf16 %v378, %v378
    %v387 = vpack.c.bf16 %v379, %v379
    %v388 = vpack.c.bf16 %v380, %v380
    %v389 = vpack.c.bf16 %v381, %v381
    %v390 = vpack.c.bf16 %v382, %v382
    %391 = vst.msk [vmem:[#allocation2] sm:$0xff] %vm126, 0.0
    %392 = vst.msk [vmem:[#allocation2 + $0x8] sm:$0xff] %vm126, 0.0
    %v393 = vld [vmem:[%s3] sm:$0xf]
    %v394 = vld [vmem:[%s3 + $0x4] sm:$0xf]
    %v395 = vld [vmem:[%s3 + $0x8] sm:$0xf]
    %v396 = vld [vmem:[%s3 + $0xc] sm:$0xf]
    %v397 = vperm.slane %v107, 2
    %v402 = vunpack.c.l.b16 %v393
    %v403 = vunpack.c.l.b16 %v394
    %v404 = vunpack.c.l.b16 %v395
    %v405 = vunpack.c.l.b16 %v396
    %v406 = vpack.c.b16 %v403, %v402
    %v407 = vpack.c.b16 %v405, %v404
    %v411 = vsel %vm126, %v104, 0
    %413 = vmatpush.bf16.msra.mxu0 0
    %414 = vmatpush.bf16.msra.mxu0 0
    %415 = vmatpush.bf16.msra.mxu0 0
    %416 = vmatpush.bf16.msra.mxu0 0
    %417 = vmatpush.bf16.msra.mxu0 0
    %418 = vmatpush.bf16.msra.mxu0 0
    %419 = vmatpush.bf16.msra.mxu0 %v407
    %420 = vmatpush.bf16.msra.mxu0 %v406
    %421 = vmatmul.bf16.gmra.mxu0 %v411
    %v422 = vpop.f32.mrf.mxu0
    %v423 = vadd.f32 %v397, %v422
    %v424 = vpop.f32.mrf.mxu0
    %v425 = vadd.f32 %v397, %v424
    %426 = vdwg.mxu0
    %v427 = vpack.c.bf16 %v425, %v423
    %v428 = vld [vmem:[#allocation2] sm:$0xff]
    %v429 = vld [vmem:[#allocation2 + $0x8] sm:$0xff]
    %v432 = vunpack.c.l.b16 %v383
    %v433 = vunpack.c.l.b16 %v384
    %v434 = vpack.c.b16 %v433, %v432
    %v436 = vsel %vm294, %v434, 0
    %438 = vmatpush.bf16.msra.mxu0 0
    %439 = vmatpush.bf16.msra.mxu0 0
    %440 = vmatpush.bf16.msra.mxu0 0
    %441 = vmatpush.bf16.msra.mxu0 0
    %442 = vmatpush.bf16.msra.mxu0 0
    %443 = vmatpush.bf16.msra.mxu0 0
    %444 = vmatpush.bf16.msra.mxu0 0
    %445 = vmatpush.bf16.msra.mxu0 %v427
    %446 = vmatmul.bf16.gmra.mxu0 %v436
    %v447 = vpop.f32.mrf.mxu0
    %v448 = vadd.f32 0.0, %v447
    %v449 = vpop.f32.mrf.mxu0
    %v450 = vadd.f32 0.0, %v449
    %451 = vdwg.mxu0
    %v452 = vadd.f32 %v428, %v448
    %v453 = vadd.f32 %v429, %v450
    %454 = vst.msk [vmem:[#allocation2] sm:$0xff] %vm126, %v452
    %455 = vst.msk [vmem:[#allocation2 + $0x8] sm:$0xff] %vm126, %v453
    %s456 = scalar_lea.vmem %s3, 16
    %v457 = vld [vmem:[%s456] sm:$0xf]
    %v458 = vld [vmem:[%s456 + $0x4] sm:$0xf]
    %v459 = vld [vmem:[%s456 + $0x8] sm:$0xf]
    %v460 = vld [vmem:[%s456 + $0xc] sm:$0xf]
    %v461 = vperm.slane %v107, 3
    %v466 = vunpack.c.l.b16 %v457
    %v467 = vunpack.c.l.b16 %v458
    %v468 = vunpack.c.l.b16 %v459
    %v469 = vunpack.c.l.b16 %v460
    %v470 = vpack.c.b16 %v467, %v466
    %v471 = vpack.c.b16 %v469, %v468
    %474 = vmatpush.bf16.msra.mxu0 0
    %475 = vmatpush.bf16.msra.mxu0 0
    %476 = vmatpush.bf16.msra.mxu0 0
    %477 = vmatpush.bf16.msra.mxu0 0
    %478 = vmatpush.bf16.msra.mxu0 0
    %479 = vmatpush.bf16.msra.mxu0 0
    %480 = vmatpush.bf16.msra.mxu0 %v471
    %481 = vmatpush.bf16.msra.mxu0 %v470
    %482 = vmatmul.bf16.gmra.mxu0 %v411
    %v483 = vpop.f32.mrf.mxu0
    %v484 = vadd.f32 %v461, %v483
    %v485 = vpop.f32.mrf.mxu0
    %v486 = vadd.f32 %v461, %v485
    %487 = vdwg.mxu0
    %v488 = vpack.c.bf16 %v486, %v484
    %v489 = vld [vmem:[#allocation2] sm:$0xff]
    %v490 = vld [vmem:[#allocation2 + $0x8] sm:$0xff]
    %v493 = vunpack.c.l.b16 %v385
    %v494 = vunpack.c.l.b16 %v386
    %v495 = vpack.c.b16 %v494, %v493
    %v497 = vsel %vm294, %v495, 0
    %499 = vmatpush.bf16.msra.mxu0 0
    %500 = vmatpush.bf16.msra.mxu0 0
    %501 = vmatpush.bf16.msra.mxu0 0
    %502 = vmatpush.bf16.msra.mxu0 0
    %503 = vmatpush.bf16.msra.mxu0 0
    %504 = vmatpush.bf16.msra.mxu0 0
    %505 = vmatpush.bf16.msra.mxu0 0
    %506 = vmatpush.bf16.msra.mxu0 %v488
    %507 = vmatmul.bf16.gmra.mxu0 %v497
    %v508 = vpop.f32.mrf.mxu0
    %v509 = vadd.f32 0.0, %v508
    %v510 = vpop.f32.mrf.mxu0
    %v511 = vadd.f32 0.0, %v510
    %512 = vdwg.mxu0
    %v513 = vadd.f32 %v489, %v509
    %v514 = vadd.f32 %v490, %v511
    %515 = vst.msk [vmem:[#allocation2] sm:$0xff] %vm126, %v513
    %516 = vst.msk [vmem:[#allocation2 + $0x8] sm:$0xff] %vm126, %v514
    %s517 = scalar_lea.vmem %s3, 32
    %v518 = vld [vmem:[%s517] sm:$0xf]
    %v519 = vld [vmem:[%s517 + $0x4] sm:$0xf]
    %v520 = vld [vmem:[%s517 + $0x8] sm:$0xf]
    %v521 = vld [vmem:[%s517 + $0xc] sm:$0xf]
    %v522 = vperm.slane %v107, 4
    %v527 = vunpack.c.l.b16 %v518
    %v528 = vunpack.c.l.b16 %v519
    %v529 = vunpack.c.l.b16 %v520
    %v530 = vunpack.c.l.b16 %v521
    %v531 = vpack.c.b16 %v528, %v527
    %v532 = vpack.c.b16 %v530, %v529
    %535 = vmatpush.bf16.msra.mxu0 0
    %536 = vmatpush.bf16.msra.mxu0 0
    %537 = vmatpush.bf16.msra.mxu0 0
    %538 = vmatpush.bf16.msra.mxu0 0
    %539 = vmatpush.bf16.msra.mxu0 0
    %540 = vmatpush.bf16.msra.mxu0 0
    %541 = vmatpush.bf16.msra.mxu0 %v532
    %542 = vmatpush.bf16.msra.mxu0 %v531
    %543 = vmatmul.bf16.gmra.mxu0 %v411
    %v544 = vpop.f32.mrf.mxu0
    %v545 = vadd.f32 %v522, %v544
    %v546 = vpop.f32.mrf.mxu0
    %v547 = vadd.f32 %v522, %v546
    %548 = vdwg.mxu0
    %v549 = vpack.c.bf16 %v547, %v545
    %v550 = vld [vmem:[#allocation2] sm:$0xff]
    %v551 = vld [vmem:[#allocation2 + $0x8] sm:$0xff]
    %v554 = vunpack.c.l.b16 %v387
    %v555 = vunpack.c.l.b16 %v388
    %v556 = vpack.c.b16 %v555, %v554
    %v558 = vsel %vm294, %v556, 0
    %560 = vmatpush.bf16.msra.mxu0 0
    %561 = vmatpush.bf16.msra.mxu0 0
    %562 = vmatpush.bf16.msra.mxu0 0
    %563 = vmatpush.bf16.msra.mxu0 0
    %564 = vmatpush.bf16.msra.mxu0 0
    %565 = vmatpush.bf16.msra.mxu0 0
    %566 = vmatpush.bf16.msra.mxu0 0
    %567 = vmatpush.bf16.msra.mxu0 %v549
    %568 = vmatmul.bf16.gmra.mxu0 %v558
    %v569 = vpop.f32.mrf.mxu0
    %v570 = vadd.f32 0.0, %v569
    %v571 = vpop.f32.mrf.mxu0
    %v572 = vadd.f32 0.0, %v571
    %573 = vdwg.mxu0
    %v574 = vadd.f32 %v550, %v570
    %v575 = vadd.f32 %v551, %v572
    %576 = vst.msk [vmem:[#allocation2] sm:$0xff] %vm126, %v574
    %577 = vst.msk [vmem:[#allocation2 + $0x8] sm:$0xff] %vm126, %v575
    %s578 = scalar_lea.vmem %s3, 48
    %v579 = vld [vmem:[%s578] sm:$0xf]
    %v580 = vld [vmem:[%s578 + $0x4] sm:$0xf]
    %v581 = vld [vmem:[%s578 + $0x8] sm:$0xf]
    %v582 = vld [vmem:[%s578 + $0xc] sm:$0xf]
    %v583 = vperm.slane %v107, 5
    %v588 = vunpack.c.l.b16 %v579
    %v589 = vunpack.c.l.b16 %v580
    %v590 = vunpack.c.l.b16 %v581
    %v591 = vunpack.c.l.b16 %v582
    %v592 = vpack.c.b16 %v589, %v588
    %v593 = vpack.c.b16 %v591, %v590
    %596 = vmatpush.bf16.msra.mxu0 0
    %597 = vmatpush.bf16.msra.mxu0 0
    %598 = vmatpush.bf16.msra.mxu0 0
    %599 = vmatpush.bf16.msra.mxu0 0
    %600 = vmatpush.bf16.msra.mxu0 0
    %601 = vmatpush.bf16.msra.mxu0 0
    %602 = vmatpush.bf16.msra.mxu0 %v593
    %603 = vmatpush.bf16.msra.mxu0 %v592
    %604 = vmatmul.bf16.gmra.mxu0 %v411
    %v605 = vpop.f32.mrf.mxu0
    %v606 = vadd.f32 %v583, %v605
    %v607 = vpop.f32.mrf.mxu0
    %v608 = vadd.f32 %v583, %v607
    %609 = vdwg.mxu0
    %v610 = vpack.c.bf16 %v608, %v606
    %v611 = vld [vmem:[#allocation2] sm:$0xff]
    %v612 = vld [vmem:[#allocation2 + $0x8] sm:$0xff]
    %v615 = vunpack.c.l.b16 %v389
    %v616 = vunpack.c.l.b16 %v390
    %v617 = vpack.c.b16 %v616, %v615
    %v619 = vsel %vm294, %v617, 0
    %621 = vmatpush.bf16.msra.mxu0 0
    %622 = vmatpush.bf16.msra.mxu0 0
    %623 = vmatpush.bf16.msra.mxu0 0
    %624 = vmatpush.bf16.msra.mxu0 0
    %625 = vmatpush.bf16.msra.mxu0 0
    %626 = vmatpush.bf16.msra.mxu0 0
    %627 = vmatpush.bf16.msra.mxu0 0
    %628 = vmatpush.bf16.msra.mxu0 %v610
    %629 = vmatmul.bf16.gmra.mxu0 %v619
    %v630 = vpop.f32.mrf.mxu0
    %v631 = vadd.f32 0.0, %v630
    %v632 = vpop.f32.mrf.mxu0
    %v633 = vadd.f32 0.0, %v632
    %634 = vdwg.mxu0
    %v635 = vadd.f32 %v611, %v631
    %v636 = vadd.f32 %v612, %v633
    %637 = vst.msk [vmem:[#allocation2] sm:$0xff] %vm126, %v635
    %638 = vst.msk [vmem:[#allocation2 + $0x8] sm:$0xff] %vm126, %v636
    %v639 = vld [vmem:[#allocation2] sm:$0xff]
    %v640 = vld [vmem:[#allocation2 + $0x8] sm:$0xff]
    %v641 = vperm.slane %v107, 6
    %v642 = vadd.f32 %v639, %v641
    %v643 = vadd.f32 %v640, %v641
    %v644 = vadd.f32 %v642, %v94
    %v645 = vadd.f32 %v643, %v95
    %v646 = vsel %vm126, %v644, 0.0
    %647 = vadd.xlane.f32.xlu0 %v646
    %v648 = vpop.xlane.xlu0 %647
    %v649 = vsel %vm126, %v645, 0.0
    %650 = vadd.xlane.f32.xlu0 %v649
    %v651 = vpop.xlane.xlu0 %650
    %v652 = vrcp.pop 32.0
    %v653 = vmul.f32 32.0, %v652
    %v654 = vsub.f32 1.0, %v653
    %v655 = vmul.f32 %v652, %v654
    %v656 = vadd.f32 %v652, %v655
    %vm657 = vweird.f32 %v652
    %v658 = vsel %vm657, %v652, %v656
    %v659 = vmul.f32 %v648, %v658
    %v660 = vmul.f32 %v651, %v658
    %v661 = vsub.f32 %v644, %v659
    %v662 = vsub.f32 %v645, %v660
    %v663 = vmul.f32 %v661, %v661
    %v664 = vmul.f32 %v662, %v662
    %v665 = vsel %vm126, %v663, 0.0
    %666 = vadd.xlane.f32.xlu0 %v665
    %v667 = vpop.xlane.xlu0 %666
    %v668 = vsel %vm126, %v664, 0.0
    %669 = vadd.xlane.f32.xlu0 %v668
    %v670 = vpop.xlane.xlu0 %669
    %v671 = vmul.f32 %v667, %v658
    %v672 = vmul.f32 %v670, %v658
    %v673 = vadd.f32 %v671, 1e-05
    %v674 = vadd.f32 %v672, 1e-05
    %v675 = vrsqrt.pop %v673
    %v676 = vmul.f32 %v675, %v673
    %v677 = vmul.f32 %v676, %v675
    %v678 = vmul.f32 0.5, %v677
    %v679 = vsub.f32 1.5, %v678
    %v680 = vmul.f32 %v675, %v679
    %vm681 = vweird.f32 %v673
    %vm682 = vweird.f32 %v675
    %vm683 = vmor %vm681, %vm682
    %v684 = vsel %vm683, %v675, %v680
    %v685 = vrsqrt.pop %v674
    %v686 = vmul.f32 %v685, %v674
    %v687 = vmul.f32 %v686, %v685
    %v688 = vmul.f32 0.5, %v687
    %v689 = vsub.f32 1.5, %v688
    %v690 = vmul.f32 %v685, %v689
    %vm691 = vweird.f32 %v674
    %vm692 = vweird.f32 %v685
    %vm693 = vmor %vm691, %vm692
    %v694 = vsel %vm693, %v685, %v690
    %v695 = vmul.f32 %v661, %v684
    %v696 = vmul.f32 %v662, %v694
    %v697 = vperm.slane %v107, 7
    %v698 = vmul.f32 %v695, %v697
    %v699 = vmul.f32 %v696, %v697
    %v700 = vperm.slane %v108, 0
    %v701 = vadd.f32 %v698, %v700
    %v702 = vadd.f32 %v699, %v700
    %v703 = vpack.c.bf16 %v702, %v701
    %v704 = vld [vmem:[#allocation8] sm:$0xf]
    %v705 = vld [vmem:[#allocation8 + $0x4] sm:$0xf]
    %v706 = vld [vmem:[#allocation8 + $0x8] sm:$0xf]
    %v707 = vld [vmem:[#allocation8 + $0xc] sm:$0xf]
    %v708 = vld [vmem:[%s7] sm:$0x1]
    %v710 = vperm.slane %v708, 0
    %v716 = vunpack.c.l.b16 %v704
    %v717 = vunpack.c.l.b16 %v705
    %v718 = vunpack.c.l.b16 %v706
    %v719 = vunpack.c.l.b16 %v707
    %v720 = vpack.c.b16 %v717, %v716
    %v721 = vpack.c.b16 %v719, %v718
    %v725 = vsel %vm126, %v703, 0
    %727 = vmatpush.bf16.msra.mxu0 0
    %728 = vmatpush.bf16.msra.mxu0 0
    %729 = vmatpush.bf16.msra.mxu0 0
    %730 = vmatpush.bf16.msra.mxu0 0
    %731 = vmatpush.bf16.msra.mxu0 0
    %732 = vmatpush.bf16.msra.mxu0 0
    %733 = vmatpush.bf16.msra.mxu0 %v721
    %734 = vmatpush.bf16.msra.mxu0 %v720
    %735 = vmatmul.bf16.gmra.mxu0 %v725
    %v736 = vpop.f32.mrf.mxu0
    %v737 = vadd.f32 %v710, %v736
    %v738 = vpop.f32.mrf.mxu0
    %v739 = vadd.f32 %v710, %v738
    %740 = vdwg.mxu0
    %v741 = vmax.f32 %v737, 0.0
    %v742 = vmax.f32 %v739, 0.0
    %v743 = vpack.c.bf16 %v742, %v741
    %v744 = vld [vmem:[%s5] sm:$0xf]
    %v745 = vld [vmem:[%s5 + $0x4] sm:$0xf]
    %v746 = vld [vmem:[%s5 + $0x8] sm:$0xf]
    %v747 = vld [vmem:[%s5 + $0xc] sm:$0xf]
    %v748 = vld [vmem:[%s5 + $0x10] sm:$0xf]
    %v749 = vld [vmem:[%s5 + $0x14] sm:$0xf]
    %v750 = vld [vmem:[%s5 + $0x18] sm:$0xf]
    %v751 = vld [vmem:[%s5 + $0x1c] sm:$0xf]
    %v752 = vld [vmem:[%s5 + $0x20] sm:$0xf]
    %v753 = vld [vmem:[%s5 + $0x24] sm:$0xf]
    %v754 = vld [vmem:[%s5 + $0x28] sm:$0xf]
    %v755 = vld [vmem:[%s5 + $0x2c] sm:$0xf]
    %v756 = vld [vmem:[%s5 + $0x30] sm:$0xf]
    %v757 = vld [vmem:[%s5 + $0x34] sm:$0xf]
    %v758 = vld [vmem:[%s5 + $0x38] sm:$0xf]
    %v759 = vld [vmem:[%s5 + $0x3c] sm:$0xf]
    %v760 = vperm.slane %v108, 1
    %v777 = vunpack.c.l.b16 %v744
    %v778 = vunpack.c.l.b16 %v745
    %v779 = vunpack.c.l.b16 %v746
    %v780 = vunpack.c.l.b16 %v747
    %v781 = vunpack.c.l.b16 %v748
    %v782 = vunpack.c.l.b16 %v749
    %v783 = vunpack.c.l.b16 %v750
    %v784 = vunpack.c.l.b16 %v751
    %v785 = vunpack.c.l.b16 %v752
    %v786 = vunpack.c.l.b16 %v753
    %v787 = vunpack.c.l.b16 %v754
    %v788 = vunpack.c.l.b16 %v755
    %v789 = vunpack.c.l.b16 %v756
    %v790 = vunpack.c.l.b16 %v757
    %v791 = vunpack.c.l.b16 %v758
    %v792 = vunpack.c.l.b16 %v759
    %v793 = vpack.c.b16 %v778, %v777
    %v794 = vpack.c.b16 %v780, %v779
    %v795 = vpack.c.b16 %v782, %v781
    %v796 = vpack.c.b16 %v784, %v783
    %v797 = vpack.c.b16 %v786, %v785
    %v798 = vpack.c.b16 %v788, %v787
    %v799 = vpack.c.b16 %v790, %v789
    %v800 = vpack.c.b16 %v792, %v791
    %809 = vmatpush.bf16.msra.mxu0 %v800
    %810 = vmatpush.bf16.msra.mxu0 %v799
    %811 = vmatpush.bf16.msra.mxu0 %v798
    %812 = vmatpush.bf16.msra.mxu0 %v797
    %813 = vmatpush.bf16.msra.mxu0 %v796
    %814 = vmatpush.bf16.msra.mxu0 %v795
    %815 = vmatpush.bf16.msra.mxu0 %v794
    %816 = vmatpush.bf16.msra.mxu0 %v793
    %817 = vmatmul.bf16.gmra.mxu0 %v743
    %v818 = vpop.f32.mrf.mxu0
    %v819 = vadd.f32 %v760, %v818
    %v820 = vpop.f32.mrf.mxu0
    %v821 = vadd.f32 %v760, %v820
    %822 = vdwg.mxu0
    %v823 = vadd.f32 %v819, %v701
    %v824 = vadd.f32 %v821, %v702
    %v825 = vsel %vm126, %v823, 0.0
    %826 = vadd.xlane.f32.xlu0 %v825
    %v827 = vpop.xlane.xlu0 %826
    %v828 = vsel %vm126, %v824, 0.0
    %829 = vadd.xlane.f32.xlu0 %v828
    %v830 = vpop.xlane.xlu0 %829
    %v831 = vmul.f32 %v827, %v658
    %v832 = vmul.f32 %v830, %v658
    %v833 = vsub.f32 %v823, %v831
    %v834 = vsub.f32 %v824, %v832
    %v835 = vmul.f32 %v833, %v833
    %v836 = vmul.f32 %v834, %v834
    %v837 = vsel %vm126, %v835, 0.0
    %838 = vadd.xlane.f32.xlu0 %v837
    %v839 = vpop.xlane.xlu0 %838
    %v840 = vsel %vm126, %v836, 0.0
    %841 = vadd.xlane.f32.xlu0 %v840
    %v842 = vpop.xlane.xlu0 %841
    %v843 = vmul.f32 %v839, %v658
    %v844 = vmul.f32 %v842, %v658
    %v845 = vadd.f32 %v843, 1e-05
    %v846 = vadd.f32 %v844, 1e-05
    %v847 = vrsqrt.pop %v845
    %v848 = vmul.f32 %v847, %v845
    %v849 = vmul.f32 %v848, %v847
    %v850 = vmul.f32 0.5, %v849
    %v851 = vsub.f32 1.5, %v850
    %v852 = vmul.f32 %v847, %v851
    %vm853 = vweird.f32 %v845
    %vm854 = vweird.f32 %v847
    %vm855 = vmor %vm853, %vm854
    %v856 = vsel %vm855, %v847, %v852
    %v857 = vrsqrt.pop %v846
    %v858 = vmul.f32 %v857, %v846
    %v859 = vmul.f32 %v858, %v857
    %v860 = vmul.f32 0.5, %v859
    %v861 = vsub.f32 1.5, %v860
    %v862 = vmul.f32 %v857, %v861
    %vm863 = vweird.f32 %v846
    %vm864 = vweird.f32 %v857
    %vm865 = vmor %vm863, %vm864
    %v866 = vsel %vm865, %v857, %v862
    %v867 = vmul.f32 %v833, %v856
    %v868 = vmul.f32 %v834, %v866
    %v869 = vperm.slane %v108, 2
    %v870 = vmul.f32 %v867, %v869
    %v871 = vmul.f32 %v868, %v869
    %v872 = vperm.slane %v108, 3
    %v873 = vadd.f32 %v870, %v872
    %v874 = vadd.f32 %v871, %v872
    %875 = vst.msk [vmem:[#allocation11] sm:$0xff] %vm126, %v873
    %876 = vst.msk [vmem:[#allocation11 + $0x8] sm:$0xff] %vm126, %v874
    // Predicated region
    $region50: #{tpu_custom_call.1} parent=1 // pred_check
      _
    $region51: #{tpu_custom_call.1} parent=1 // pred_check_branch
      %878 = sbr.rel (0) target = $region53
    $region52: #{tpu_custom_call.1} parent=1 // pred_region
      %880 = vsyncadd [#allocation5], 0
      %s881 = sshll.u32 [#allocation11], 4
      %s882 = int_to_ptr.vmem [resolvable:$true] %s881
      %s883 = sshll.u32 %s8, 4
      %s884 = int_to_ptr.hbm [resolvable:$true] %s883
      %889 = dma.vmem_to_hbm [thread:$0]  %s882, 256, %s884, [#allocation5], 128, 128, 8
    $region53: #{tpu_custom_call.1} parent=1 // pred_fallthru
      _
    // Predicated region
    $region54: #{tpu_custom_call.1} parent=1 // pred_check
      _
    $region55: #{tpu_custom_call.1} parent=1 // pred_check_branch
      %891 = sbr.rel (0) target = $region57
    $region56: #{tpu_custom_call.1} parent=1 // pred_region
      %893 = dma.done [#allocation5], 256
    $region57: #{tpu_custom_call.1} parent=1 // pred_fallthru
      _
    %894 = vsyncpa [#allocation4], 1
    %895 = vsyncpa [#allocation7], 1
    %896 = vsyncpa [#allocation10], 1
    %897 = vsyncpa [#allocation5], 1

</llo_original>
